<compile_context>
chip_gen: v7x
topology: tpu7x:2x2x1
jax: 0.10.0
libtpu: 0.0.40
codegen_flags: <defaults>
</compile_context>

<pallas_src>
import jax
import jax.numpy as jnp
from jax.experimental import pallas as pl
from jax.experimental.pallas import tpu as pltpu

B_SZ     = 2                 # batch
TRUNK_IN = 8                 # trunk (operator/query) input dim
H        = 32                # trunk hidden width
FEAT     = 32                # branch.planes[-1] == trunk output width
C_IN     = 4                 # branch conv input channels
L        = 16                # branch sequence length
K        = 3                 # conv kernel size
PAD      = (K - 1) // 2
C1       = 16                # conv layer-1 channels
C2       = 32                # conv layer-2 channels
OUT_DIM  = 2                 # target_net output dim
L2       = L - K + 1         # conv2 ('valid') output length = 14

XB_FLAT  = C_IN * L          # 64   flattened conv input per sample (channel-major)
Y1_FLAT  = L * C1            # 256  flattened conv1 output per sample (position-major)
Y2_FLAT  = L2 * C2           # 448  flattened conv2 output per sample (position-major)

# ---------------------------------------------------------------------------------------
# Parameter slab: one (328, 512) f32 array.  Row starts are multiples of 8; the banded conv
# matrices sit at lane 0, the small matrices/biases are lane-packed into a side band so the
# slab stays as small as the banded-conv formulation allows (~660 KiB, well under VMEM).
# ---------------------------------------------------------------------------------------
_SLAB_COLS = 512
_SIDE      = Y2_FLAT         # 448: first free lane column to the right of w2big

_LAYOUT = {
    #  name     (row, col,     nrows,     ncols)
    "w2big": (0,   0,      Y1_FLAT,  Y2_FLAT),   # (256, 448) banded 'valid' conv2
    "w1":    (0,   _SIDE,  TRUNK_IN, H),         # (8, 32)
    "w2":    (8,   _SIDE,  H,        H),         # (32, 32)
    "w3":    (40,  _SIDE,  H,        FEAT),      # (32, 32)
    "wbp":   (72,  _SIDE,  C2,       FEAT),      # (32, 32)  wb / L2 (mean pool folded in)
    "wt":    (104, _SIDE,  FEAT,     OUT_DIM),   # (32, 2)
    "b1":    (136, _SIDE,  B_SZ,     H),         # biases pre-broadcast to B_SZ rows
    "b2":    (144, _SIDE,  B_SZ,     H),
    "b3":    (152, _SIDE,  B_SZ,     FEAT),
    "bb":    (160, _SIDE,  B_SZ,     FEAT),
    "bt":    (168, _SIDE,  B_SZ,     OUT_DIM),
    "w1big": (256, 0,      XB_FLAT,  Y1_FLAT),   # (64, 256) banded 'same' conv1
    "bc1r":  (256, Y1_FLAT, B_SZ,    Y1_FLAT),   # (2, 256) conv1 bias, pre-tiled over l
    "bc2r":  (320, 0,      B_SZ,     Y2_FLAT),   # (2, 448) conv2 bias, pre-tiled over l
}
_SLAB_ROWS = 328


# ---------------------------------------------------------------------------------------
# Kernel: 7 MXU dots (3 trunk, 2 conv, branch fc, target), one output store.
# ---------------------------------------------------------------------------------------
def predictor_kernel(xt_ref, xb_ref, w_ref, out_ref, x2_scr):
    f32 = jnp.float32

    def par(name):
        r, c, nr, nc = _LAYOUT[name]
        return w_ref[r:r + nr, c:c + nc]          # static slices of the weight slab

    # ---------------- trunk: T = trunc_net(input) --------------------------------------
    t = jnp.tanh(jnp.dot(xt_ref[...], par("w1"), preferred_element_type=f32) + par("b1"))
    t = jnp.tanh(jnp.dot(t, par("w2"), preferred_element_type=f32) + par("b2"))
    T = jnp.dot(t, par("w3"), preferred_element_type=f32) + par("b3")       # (B, FEAT)

    # ---------------- branch: in-kernel NCL flatten (8 tiny sub-tile copies) -----------
    # x2[b, ci*L + p] = conv[b, ci, p]; only leading-dim integer indexing + trailing slices.
    for b in range(B_SZ):
        for ci in range(C_IN):
            x2_scr[b:b + 1, ci * L:(ci + 1) * L] = xb_ref[b, ci:ci + 1, :]
    x2 = x2_scr[...]                                                        # (B, C_IN*L)

    # conv1 ('same') + ReLU as one banded matmul, positions flattened into lanes.
    y1 = jnp.maximum(
        jnp.dot(x2, par("w1big"), preferred_element_type=f32) + par("bc1r"), 0.0)  # (B, L*C1)
    # conv2 ('valid') + ReLU likewise.
    y2 = jnp.maximum(
        jnp.dot(y1, par("w2big"), preferred_element_type=f32) + par("bc2r"), 0.0)  # (B, L2*C2)

    # Global mean pool over positions: sum the L2 per-position lane blocks (VPU work, off the
    # MXU); the 1/L2 scale is folded into wbp at pack time.
    psum = y2[:, 0:C2]
    for l in range(1, L2):
        psum = psum + y2[:, l * C2:(l + 1) * C2]                            # (B, C2)
    Bf = jnp.dot(psum, par("wbp"), preferred_element_type=f32) + par("bb")  # (B, FEAT)

    # ---------------- DeepONet merge + target_net, single store ------------------------
    feature = Bf * T
    out_ref[...] = jnp.dot(feature, par("wt"), preferred_element_type=f32) + par("bt")


@jax.jit
def predictor_forward(x_t, x_b_ncl, slab):
    """x_t: (B, TRUNK_IN) f32; x_b_ncl: (B, C_IN, L) f32 (PyTorch Conv1d NCL layout).

    No wrapper-side ops: the raw tensors go straight into the kernel (3 DMAs total).
    """
    vmem = pl.BlockSpec(memory_space=pltpu.MemorySpace.VMEM)
    # NOTE(v7x): at larger batch, add a leading batch grid axis with
    # dimension_semantics=('parallel',) to shard across the two TensorCores; at B=2 the
    # grid-less call avoids the per-step pipelining overhead.
    return pl.pallas_call(
        predictor_kernel,
        out_shape=jax.ShapeDtypeStruct((B_SZ, OUT_DIM), jnp.float32),
        in_specs=[vmem, vmem, vmem],
        out_specs=vmem,
        scratch_shapes=[pltpu.VMEM((B_SZ, XB_FLAT), jnp.float32)],
    )(x_t, x_b_ncl, slab)


# ---------------------------------------------------------------------------------------
# One-time parameter preprocessing (done at init, not per call).
# ---------------------------------------------------------------------------------------
def pack_params(p):
    f32 = jnp.float32

    # conv1 ('same') as a banded matrix acting on the channel-major flattened input:
    #   w1big[ci*L + pos, l*C1 + c] = wc1[pos - l + PAD, ci, c]   for 0 <= pos-l+PAD < K
    w1big = jnp.zeros((XB_FLAT, Y1_FLAT), f32)
    for l in range(L):
        for k in range(K):
            pos = l + k - PAD
            if 0 <= pos < L:
                w1big = w1big.at[pos::L, l * C1:(l + 1) * C1].set(p["wc1"][k])

    # conv2 ('valid') as a banded matrix acting on the position-major conv1 output:
    #   w2big[pos*C1 + c1, l*C2 + c2] = wc2[pos - l, c1, c2]      for 0 <= pos-l < K
    w2big = jnp.zeros((Y1_FLAT, Y2_FLAT), f32)
    for l in range(L2):
        for k in range(K):
            pos = l + k
            w2big = w2big.at[pos * C1:(pos + 1) * C1, l * C2:(l + 1) * C2].set(p["wc2"][k])

    vals = {
        "w2big": w2big,
        "w1big": w1big,
        "w1": p["w1"], "w2": p["w2"], "w3": p["w3"],
        "wbp": p["wb"] / jnp.float32(L2),          # mean pool folded into the branch fc
        "wt": p["wt"],
        # biases pre-broadcast to B_SZ rows (and pre-tiled over positions): the kernel does
        # plain row-aligned adds, no in-kernel broadcasts.
        "b1": jnp.tile(p["b1"], (B_SZ, 1)),
        "b2": jnp.tile(p["b2"], (B_SZ, 1)),
        "b3": jnp.tile(p["b3"], (B_SZ, 1)),
        "bb": jnp.tile(p["bb"], (B_SZ, 1)),
        "bt": jnp.tile(p["bt"], (B_SZ, 1)),
        "bc1r": jnp.tile(p["bc1"], (B_SZ, L)),
        "bc2r": jnp.tile(p["bc2"], (B_SZ, L2)),
    }

    slab = jnp.zeros((_SLAB_ROWS, _SLAB_COLS), f32)
    for name, (r, c, nr, nc) in _LAYOUT.items():
        v = vals[name].astype(f32)
        assert v.shape == (nr, nc), (name, v.shape, (nr, nc))
        slab = slab.at[r:r + nr, c:c + nc].set(v)
    return slab


def predictor_ref(x_t, x_b_ncl, p):
    """Pure-JAX reference (same math as the PyTorch module) used to validate the kernel."""
    t = jnp.tanh(x_t @ p["w1"] + p["b1"])
    t = jnp.tanh(t @ p["w2"] + p["b2"])
    T = t @ p["w3"] + p["b3"]
    xb = jnp.pad(jnp.transpose(x_b_ncl, (0, 2, 1)), ((0, 0), (PAD, PAD), (0, 0)))
    y1 = sum(jnp.einsum("blc,co->blo", xb[:, k:k + L, :], p["wc1"][k]) for k in range(K))
    y1 = jnp.maximum(y1 + p["bc1"][None], 0.0)
    y2 = sum(jnp.einsum("blc,co->blo", y1[:, k:k + L2, :], p["wc2"][k]) for k in range(K))
    y2 = jnp.maximum(y2 + p["bc2"][None], 0.0)
    Bf = jnp.mean(y2, axis=1) @ p["wb"] + p["bb"]
    return (Bf * T) @ p["wt"] + p["bt"]


def init_params(key):
    ks = jax.random.split(key, 14)
    def w(k, shape, fan_in):
        return (jax.random.normal(k, shape, dtype=jnp.float32) /
                jnp.sqrt(jnp.float32(fan_in))).astype(jnp.float32)
    def bias(k, n):
        return (0.01 * jax.random.normal(k, (1, n), dtype=jnp.float32)).astype(jnp.float32)
    return {
        "w1": w(ks[0], (TRUNK_IN, H), TRUNK_IN),   "b1": bias(ks[1], H),
        "w2": w(ks[2], (H, H), H),                 "b2": bias(ks[3], H),
        "w3": w(ks[4], (H, FEAT), H),              "b3": bias(ks[5], FEAT),
        "wc1": w(ks[6], (K, C_IN, C1), K * C_IN),  "bc1": bias(ks[7], C1),
        "wc2": w(ks[8], (K, C1, C2), K * C1),      "bc2": bias(ks[9], C2),
        "wb": w(ks[10], (C2, FEAT), C2),           "bb": bias(ks[11], FEAT),
        "wt": w(ks[12], (FEAT, OUT_DIM), FEAT),    "bt": bias(ks[13], OUT_DIM),
    }


if __name__ == "__main__":
    key = jax.random.PRNGKey(0)
    kx, kb, kp = jax.random.split(key, 3)
    x_t = jax.random.normal(kx, (B_SZ, TRUNK_IN), dtype=jnp.float32)   # trunk `input`
    x_b = jax.random.normal(kb, (B_SZ, C_IN, L), dtype=jnp.float32)    # branch `conv` (NCL)
    params = init_params(kp)
    slab = pack_params(params)                                         # one-time packing

    out = jax.block_until_ready(predictor_forward(x_t, x_b, slab))
    ref = jax.block_until_ready(predictor_ref(x_t, x_b, params))
    assert out.shape == (B_SZ, OUT_DIM), out.shape
    assert jnp.allclose(out, ref, atol=1e-4, rtol=1e-4), (out, ref)
    print("KERNEL_OK")
</pallas_src>

<mosaic_0001>
module attributes {stable_mosaic.version = 11 : i64} {
  func.func @predictor_kernel(%arg0: memref<2x8xf32, #tpu.memory_space<vmem>>, %arg1: memref<2x4x16xf32, #tpu.memory_space<vmem>>, %arg2: memref<328x512xf32, #tpu.memory_space<vmem>>, %arg3: memref<2x2xf32, #tpu.memory_space<vmem>>, %arg4: memref<2x64xf32, #tpu.memory_space<vmem>>) attributes {dimension_semantics = [], scalar_prefetch = 0 : i64, scratch_operands = 1 : i64, tpu.core_type = #tpu.core_type<tc>} {
    %c0 = arith.constant 0 : index
    %c0_0 = arith.constant 0 : index
    %0 = vector.load %arg0[%c0, %c0_0] : memref<2x8xf32, #tpu.memory_space<vmem>>, vector<2x8xf32>
    %c0_1 = arith.constant 0 : index
    %c448 = arith.constant 448 : index
    %1 = vector.load %arg2[%c0_1, %c448] : memref<328x512xf32, #tpu.memory_space<vmem>>, vector<8x32xf32>
    %cst = arith.constant dense<0.000000e+00> : vector<2x32xf32>
    %2 = tpu.matmul %0, %1, %cst {dimension_numbers = #tpu.dot_dimension_numbers<[1], [0], [0], [1], [0, 0, 1, 1], [], []>} : vector<2x8xf32>, vector<8x32xf32>, vector<2x32xf32> -> vector<2x32xf32>
    %c136 = arith.constant 136 : index
    %c448_2 = arith.constant 448 : index
    %3 = vector.load %arg2[%c136, %c448_2] : memref<328x512xf32, #tpu.memory_space<vmem>>, vector<2x32xf32>
    %4 = arith.addf %2, %3 : vector<2x32xf32>
    %5 = math.tanh %4 : vector<2x32xf32>
    %c8 = arith.constant 8 : index
    %c448_3 = arith.constant 448 : index
    %6 = vector.load %arg2[%c8, %c448_3] : memref<328x512xf32, #tpu.memory_space<vmem>>, vector<32x32xf32>
    %cst_4 = arith.constant dense<0.000000e+00> : vector<2x32xf32>
    %7 = tpu.matmul %5, %6, %cst_4 {dimension_numbers = #tpu.dot_dimension_numbers<[1], [0], [0], [1], [0, 0, 1, 1], [], []>} : vector<2x32xf32>, vector<32x32xf32>, vector<2x32xf32> -> vector<2x32xf32>
    %c144 = arith.constant 144 : index
    %c448_5 = arith.constant 448 : index
    %8 = vector.load %arg2[%c144, %c448_5] : memref<328x512xf32, #tpu.memory_space<vmem>>, vector<2x32xf32>
    %9 = arith.addf %7, %8 : vector<2x32xf32>
    %10 = math.tanh %9 : vector<2x32xf32>
    %c40 = arith.constant 40 : index
    %c448_6 = arith.constant 448 : index
    %11 = vector.load %arg2[%c40, %c448_6] : memref<328x512xf32, #tpu.memory_space<vmem>>, vector<32x32xf32>
    %cst_7 = arith.constant dense<0.000000e+00> : vector<2x32xf32>
    %12 = tpu.matmul %10, %11, %cst_7 {dimension_numbers = #tpu.dot_dimension_numbers<[1], [0], [0], [1], [0, 0, 1, 1], [], []>} : vector<2x32xf32>, vector<32x32xf32>, vector<2x32xf32> -> vector<2x32xf32>
    %c152 = arith.constant 152 : index
    %c448_8 = arith.constant 448 : index
    %13 = vector.load %arg2[%c152, %c448_8] : memref<328x512xf32, #tpu.memory_space<vmem>>, vector<2x32xf32>
    %14 = arith.addf %12, %13 : vector<2x32xf32>
    %c0_9 = arith.constant 0 : index
    %c0_10 = arith.constant 0 : index
    %c0_11 = arith.constant 0 : index
    %15 = vector.load %arg1[%c0_9, %c0_10, %c0_11] : memref<2x4x16xf32, #tpu.memory_space<vmem>>, vector<1x1x16xf32>
    %16 = vector.shape_cast %15 : vector<1x1x16xf32> to vector<1x16xf32>
    %c0_12 = arith.constant 0 : index
    %c0_13 = arith.constant 0 : index
    %17 = vector.load %arg4[%c0_12, %c0_13] : memref<2x64xf32, #tpu.memory_space<vmem>>, vector<1x16xf32>
    tpu.vector_store %arg4[%c0_12, %c0_13], %16 {strides = array<i32>} : memref<2x64xf32, #tpu.memory_space<vmem>>, vector<1x16xf32>,
    %c0_14 = arith.constant 0 : index
    %c1 = arith.constant 1 : index
    %c0_15 = arith.constant 0 : index
    %18 = vector.load %arg1[%c0_14, %c1, %c0_15] : memref<2x4x16xf32, #tpu.memory_space<vmem>>, vector<1x1x16xf32>
    %19 = vector.shape_cast %18 : vector<1x1x16xf32> to vector<1x16xf32>
    %c0_16 = arith.constant 0 : index
    %c16 = arith.constant 16 : index
    %20 = vector.load %arg4[%c0_16, %c16] : memref<2x64xf32, #tpu.memory_space<vmem>>, vector<1x16xf32>
    tpu.vector_store %arg4[%c0_16, %c16], %19 {strides = array<i32>} : memref<2x64xf32, #tpu.memory_space<vmem>>, vector<1x16xf32>,
    %c0_17 = arith.constant 0 : index
    %c2 = arith.constant 2 : index
    %c0_18 = arith.constant 0 : index
    %21 = vector.load %arg1[%c0_17, %c2, %c0_18] : memref<2x4x16xf32, #tpu.memory_space<vmem>>, vector<1x1x16xf32>
    %22 = vector.shape_cast %21 : vector<1x1x16xf32> to vector<1x16xf32>
    %c0_19 = arith.constant 0 : index
    %c32 = arith.constant 32 : index
    %23 = vector.load %arg4[%c0_19, %c32] : memref<2x64xf32, #tpu.memory_space<vmem>>, vector<1x16xf32>
    tpu.vector_store %arg4[%c0_19, %c32], %22 {strides = array<i32>} : memref<2x64xf32, #tpu.memory_space<vmem>>, vector<1x16xf32>,
    %c0_20 = arith.constant 0 : index
    %c3 = arith.constant 3 : index
    %c0_21 = arith.constant 0 : index
    %24 = vector.load %arg1[%c0_20, %c3, %c0_21] : memref<2x4x16xf32, #tpu.memory_space<vmem>>, vector<1x1x16xf32>
    %25 = vector.shape_cast %24 : vector<1x1x16xf32> to vector<1x16xf32>
    %c0_22 = arith.constant 0 : index
    %c48 = arith.constant 48 : index
    %26 = vector.load %arg4[%c0_22, %c48] : memref<2x64xf32, #tpu.memory_space<vmem>>, vector<1x16xf32>
    tpu.vector_store %arg4[%c0_22, %c48], %25 {strides = array<i32>} : memref<2x64xf32, #tpu.memory_space<vmem>>, vector<1x16xf32>,
    %c1_23 = arith.constant 1 : index
    %c0_24 = arith.constant 0 : index
    %c0_25 = arith.constant 0 : index
    %27 = vector.load %arg1[%c1_23, %c0_24, %c0_25] : memref<2x4x16xf32, #tpu.memory_space<vmem>>, vector<1x1x16xf32>
    %28 = vector.shape_cast %27 : vector<1x1x16xf32> to vector<1x16xf32>
    %c1_26 = arith.constant 1 : index
    %c0_27 = arith.constant 0 : index
    %29 = vector.load %arg4[%c1_26, %c0_27] : memref<2x64xf32, #tpu.memory_space<vmem>>, vector<1x16xf32>
    tpu.vector_store %arg4[%c1_26, %c0_27], %28 {strides = array<i32>} : memref<2x64xf32, #tpu.memory_space<vmem>>, vector<1x16xf32>,
    %c1_28 = arith.constant 1 : index
    %c1_29 = arith.constant 1 : index
    %c0_30 = arith.constant 0 : index
    %30 = vector.load %arg1[%c1_28, %c1_29, %c0_30] : memref<2x4x16xf32, #tpu.memory_space<vmem>>, vector<1x1x16xf32>
    %31 = vector.shape_cast %30 : vector<1x1x16xf32> to vector<1x16xf32>
    %c1_31 = arith.constant 1 : index
    %c16_32 = arith.constant 16 : index
    %32 = vector.load %arg4[%c1_31, %c16_32] : memref<2x64xf32, #tpu.memory_space<vmem>>, vector<1x16xf32>
    tpu.vector_store %arg4[%c1_31, %c16_32], %31 {strides = array<i32>} : memref<2x64xf32, #tpu.memory_space<vmem>>, vector<1x16xf32>,
    %c1_33 = arith.constant 1 : index
    %c2_34 = arith.constant 2 : index
    %c0_35 = arith.constant 0 : index
    %33 = vector.load %arg1[%c1_33, %c2_34, %c0_35] : memref<2x4x16xf32, #tpu.memory_space<vmem>>, vector<1x1x16xf32>
    %34 = vector.shape_cast %33 : vector<1x1x16xf32> to vector<1x16xf32>
    %c1_36 = arith.constant 1 : index
    %c32_37 = arith.constant 32 : index
    %35 = vector.load %arg4[%c1_36, %c32_37] : memref<2x64xf32, #tpu.memory_space<vmem>>, vector<1x16xf32>
    tpu.vector_store %arg4[%c1_36, %c32_37], %34 {strides = array<i32>} : memref<2x64xf32, #tpu.memory_space<vmem>>, vector<1x16xf32>,
    %c1_38 = arith.constant 1 : index
    %c3_39 = arith.constant 3 : index
    %c0_40 = arith.constant 0 : index
    %36 = vector.load %arg1[%c1_38, %c3_39, %c0_40] : memref<2x4x16xf32, #tpu.memory_space<vmem>>, vector<1x1x16xf32>
    %37 = vector.shape_cast %36 : vector<1x1x16xf32> to vector<1x16xf32>
    %c1_41 = arith.constant 1 : index
    %c48_42 = arith.constant 48 : index
    %38 = vector.load %arg4[%c1_41, %c48_42] : memref<2x64xf32, #tpu.memory_space<vmem>>, vector<1x16xf32>
    tpu.vector_store %arg4[%c1_41, %c48_42], %37 {strides = array<i32>} : memref<2x64xf32, #tpu.memory_space<vmem>>, vector<1x16xf32>,
    %c0_43 = arith.constant 0 : index
    %c0_44 = arith.constant 0 : index
    %39 = vector.load %arg4[%c0_43, %c0_44] : memref<2x64xf32, #tpu.memory_space<vmem>>, vector<2x64xf32>
    %c256 = arith.constant 256 : index
    %c0_45 = arith.constant 0 : index
    %40 = vector.load %arg2[%c256, %c0_45] : memref<328x512xf32, #tpu.memory_space<vmem>>, vector<64x256xf32>
    %cst_46 = arith.constant dense<0.000000e+00> : vector<2x256xf32>
    %41 = tpu.matmul %39, %40, %cst_46 {dimension_numbers = #tpu.dot_dimension_numbers<[1], [0], [0], [1], [0, 0, 1, 1], [], []>} : vector<2x64xf32>, vector<64x256xf32>, vector<2x256xf32> -> vector<2x256xf32>
    %c256_47 = arith.constant 256 : index
    %c256_48 = arith.constant 256 : index
    %42 = vector.load %arg2[%c256_47, %c256_48] : memref<328x512xf32, #tpu.memory_space<vmem>>, vector<2x256xf32>
    %43 = arith.addf %41, %42 : vector<2x256xf32>
    %cst_49 = arith.constant 0.000000e+00 : f32
    %44 = vector.broadcast %cst_49 : f32 to vector<2x256xf32>
    %45 = arith.maximumf %43, %44 : vector<2x256xf32>
    %c0_50 = arith.constant 0 : index
    %c0_51 = arith.constant 0 : index
    %46 = vector.load %arg2[%c0_50, %c0_51] : memref<328x512xf32, #tpu.memory_space<vmem>>, vector<256x448xf32>
    %cst_52 = arith.constant dense<0.000000e+00> : vector<2x448xf32>
    %47 = tpu.matmul %45, %46, %cst_52 {dimension_numbers = #tpu.dot_dimension_numbers<[1], [0], [0], [1], [0, 0, 1, 1], [], []>} : vector<2x256xf32>, vector<256x448xf32>, vector<2x448xf32> -> vector<2x448xf32>
    %c320 = arith.constant 320 : index
    %c0_53 = arith.constant 0 : index
    %48 = vector.load %arg2[%c320, %c0_53] : memref<328x512xf32, #tpu.memory_space<vmem>>, vector<2x448xf32>
    %49 = arith.addf %47, %48 : vector<2x448xf32>
    %cst_54 = arith.constant 0.000000e+00 : f32
    %50 = vector.broadcast %cst_54 : f32 to vector<2x448xf32>
    %51 = arith.maximumf %49, %50 : vector<2x448xf32>
    %52 = vector.extract_strided_slice %51 {offsets = [0, 0], sizes = [2, 32], strides = [1, 1]} : vector<2x448xf32> to vector<2x32xf32>
    %53 = vector.extract_strided_slice %51 {offsets = [0, 32], sizes = [2, 32], strides = [1, 1]} : vector<2x448xf32> to vector<2x32xf32>
    %54 = arith.addf %52, %53 : vector<2x32xf32>
    %55 = vector.extract_strided_slice %51 {offsets = [0, 64], sizes = [2, 32], strides = [1, 1]} : vector<2x448xf32> to vector<2x32xf32>
    %56 = arith.addf %54, %55 : vector<2x32xf32>
    %57 = vector.extract_strided_slice %51 {offsets = [0, 96], sizes = [2, 32], strides = [1, 1]} : vector<2x448xf32> to vector<2x32xf32>
    %58 = arith.addf %56, %57 : vector<2x32xf32>
    %59 = vector.extract_strided_slice %51 {offsets = [0, 128], sizes = [2, 32], strides = [1, 1]} : vector<2x448xf32> to vector<2x32xf32>
    %60 = arith.addf %58, %59 : vector<2x32xf32>
    %61 = vector.extract_strided_slice %51 {offsets = [0, 160], sizes = [2, 32], strides = [1, 1]} : vector<2x448xf32> to vector<2x32xf32>
    %62 = arith.addf %60, %61 : vector<2x32xf32>
    %63 = vector.extract_strided_slice %51 {offsets = [0, 192], sizes = [2, 32], strides = [1, 1]} : vector<2x448xf32> to vector<2x32xf32>
    %64 = arith.addf %62, %63 : vector<2x32xf32>
    %65 = vector.extract_strided_slice %51 {offsets = [0, 224], sizes = [2, 32], strides = [1, 1]} : vector<2x448xf32> to vector<2x32xf32>
    %66 = arith.addf %64, %65 : vector<2x32xf32>
    %67 = vector.extract_strided_slice %51 {offsets = [0, 256], sizes = [2, 32], strides = [1, 1]} : vector<2x448xf32> to vector<2x32xf32>
    %68 = arith.addf %66, %67 : vector<2x32xf32>
    %69 = vector.extract_strided_slice %51 {offsets = [0, 288], sizes = [2, 32], strides = [1, 1]} : vector<2x448xf32> to vector<2x32xf32>
    %70 = arith.addf %68, %69 : vector<2x32xf32>
    %71 = vector.extract_strided_slice %51 {offsets = [0, 320], sizes = [2, 32], strides = [1, 1]} : vector<2x448xf32> to vector<2x32xf32>
    %72 = arith.addf %70, %71 : vector<2x32xf32>
    %73 = vector.extract_strided_slice %51 {offsets = [0, 352], sizes = [2, 32], strides = [1, 1]} : vector<2x448xf32> to vector<2x32xf32>
    %74 = arith.addf %72, %73 : vector<2x32xf32>
    %75 = vector.extract_strided_slice %51 {offsets = [0, 384], sizes = [2, 32], strides = [1, 1]} : vector<2x448xf32> to vector<2x32xf32>
    %76 = arith.addf %74, %75 : vector<2x32xf32>
    %77 = vector.extract_strided_slice %51 {offsets = [0, 416], sizes = [2, 32], strides = [1, 1]} : vector<2x448xf32> to vector<2x32xf32>
    %78 = arith.addf %76, %77 : vector<2x32xf32>
    %c72 = arith.constant 72 : index
    %c448_55 = arith.constant 448 : index
    %79 = vector.load %arg2[%c72, %c448_55] : memref<328x512xf32, #tpu.memory_space<vmem>>, vector<32x32xf32>
    %cst_56 = arith.constant dense<0.000000e+00> : vector<2x32xf32>
    %80 = tpu.matmul %78, %79, %cst_56 {dimension_numbers = #tpu.dot_dimension_numbers<[1], [0], [0], [1], [0, 0, 1, 1], [], []>} : vector<2x32xf32>, vector<32x32xf32>, vector<2x32xf32> -> vector<2x32xf32>
    %c160 = arith.constant 160 : index
    %c448_57 = arith.constant 448 : index
    %81 = vector.load %arg2[%c160, %c448_57] : memref<328x512xf32, #tpu.memory_space<vmem>>, vector<2x32xf32>
    %82 = arith.addf %80, %81 : vector<2x32xf32>
    %83 = arith.mulf %82, %14 : vector<2x32xf32>
    %c104 = arith.constant 104 : index
    %c448_58 = arith.constant 448 : index
    %84 = vector.load %arg2[%c104, %c448_58] : memref<328x512xf32, #tpu.memory_space<vmem>>, vector<32x2xf32>
    %cst_59 = arith.constant dense<0.000000e+00> : vector<2x2xf32>
    %85 = tpu.matmul %83, %84, %cst_59 {dimension_numbers = #tpu.dot_dimension_numbers<[1], [0], [0], [1], [0, 0, 1, 1], [], []>} : vector<2x32xf32>, vector<32x2xf32>, vector<2x2xf32> -> vector<2x2xf32>
    %c168 = arith.constant 168 : index
    %c448_60 = arith.constant 448 : index
    %86 = vector.load %arg2[%c168, %c448_60] : memref<328x512xf32, #tpu.memory_space<vmem>>, vector<2x2xf32>
    %87 = arith.addf %85, %86 : vector<2x2xf32>
    %c0_61 = arith.constant 0 : index
    %c0_62 = arith.constant 0 : index
    %88 = vector.load %arg3[%c0_61, %c0_62] : memref<2x2xf32, #tpu.memory_space<vmem>>, vector<2x2xf32>
    tpu.vector_store %arg3[%c0_61, %c0_62], %87 {strides = array<i32>} : memref<2x2xf32, #tpu.memory_space<vmem>>, vector<2x2xf32>,
    return
  }
}

</mosaic_0001>

<llo_original>
// kernel: predictor_forward.1
$region0: #{predictor_forward.1}
  #allocation0 [shape = 'u32[]', space=smem, size = 0x4, offset = 0x4, fixed_abs, tag = 'smem constant byte address 0x4 - core index']
  #allocation1 [shape = 'u32[144,128]{1,0:T(1,128)}', space=vmem, size = 0x12000, scoped, tag = 'internal scratch']
  #allocation2 [shape = 'f32[2,64]{1,0:T(2,128)}', space=vmem, size = 0x400, scoped, tag = 'scratch operand']
  %s0 = inlined_call_operand.hbm [shape: f32[2,8], index: 0, kind: input, shape index: {}]
  %s1 = inlined_call_operand.hbm [shape: f32[2,4,16], index: 1, kind: input, shape index: {}]
  %s2 = inlined_call_operand.hbm [shape: f32[328,512], index: 2, kind: input, shape index: {}]
  %s3 = inlined_call_operand.hbm [shape: f32[2,2], index: 3, kind: output, shape index: {}]
  %s4 = sld [smem:[#allocation0]]
  $region34: #{predictor_forward.1} parent=0
    _
  %s6 = ssub.s32 1, %s4
  %s7 = scalar_select 0, %s6, %s4
  $region1: #{predictor_forward.1} parent=0
    #allocation3 [shape = 'u8[1024]{0}', space=vmem, size = 0x400, scoped, tag = 'input window, operand 0, single buffered']
    #allocation4 [shape = 's32[1]{0}', space=sflag, size = 0x4, scoped, tag = 'scoped memory for predictor_forward.1']
    #allocation5 [shape = 's32[1]{0}', space=sflag, size = 0x4, scoped, tag = 'scoped memory for predictor_forward.1']
    #allocation6 [shape = 'u8[4096]{0}', space=vmem, size = 0x1000, scoped, tag = 'input window, operand 1, single buffered']
    #allocation7 [shape = 's32[1]{0}', space=sflag, size = 0x4, scoped, tag = 'scoped memory for predictor_forward.1']
    #allocation8 [shape = 'u8[671744]{0}', space=vmem, size = 0xa4000, scoped, tag = 'input window, operand 2, single buffered']
    #allocation9 [shape = 'u8[1024]{0}', space=vmem, size = 0x400, scoped, tag = 'output window, operand 0, single buffered']
    %8 = vsyncpa [#allocation4], 0
    %9 = vsyncpa [#allocation7], 0
    %10 = vsyncpa [#allocation5], 0
    // Predicated region
    $region2: #{predictor_forward.1} parent=1 // pred_check
      _
    $region3: #{predictor_forward.1} parent=1 // pred_check_branch
      %12 = sbr.rel (0) target = $region5
    $region4: #{predictor_forward.1} parent=1 // pred_region
      %s14 = ssub.s32 32, 32
      %15 = vsyncadd [#allocation4], %s14
      %s17 = sshll.u32 [#allocation3], 4
      %s18 = int_to_ptr.vmem [resolvable:$true] %s17
      %20 = dma.hbm_to_vmem [thread:$0]  %s0, 32, %s18, [#allocation4]
    $region5: #{predictor_forward.1} parent=1 // pred_fallthru
      _
    // Predicated region
    $region6: #{predictor_forward.1} parent=1 // pred_check
      _
    $region7: #{predictor_forward.1} parent=1 // pred_check_branch
      %22 = sbr.rel (0) target = $region9
    $region8: #{predictor_forward.1} parent=1 // pred_region
      %s24 = ssub.s32 128, 128
      %25 = vsyncadd [#allocation7], %s24
      %s26 = sshll.u32 [#allocation6], 4
      %s27 = int_to_ptr.vmem [resolvable:$true] %s26
      %32 = dma.hbm_to_vmem [thread:$0]  %s1, 128, %s27, [#allocation7], 64, 64, 4
    $region9: #{predictor_forward.1} parent=1 // pred_fallthru
      _
    // Predicated region
    $region10: #{predictor_forward.1} parent=1 // pred_check
      _
    $region11: #{predictor_forward.1} parent=1 // pred_check_branch
      %34 = sbr.rel (0) target = $region13
    $region12: #{predictor_forward.1} parent=1 // pred_region
      %s36 = ssub.s32 20992, 20992
      %37 = vsyncadd [#allocation7], %s36
      %s38 = sshll.u32 [#allocation8], 4
      %s39 = int_to_ptr.vmem [resolvable:$true] %s38
      %44 = dma.hbm_to_vmem [thread:$0]  %s2, 20992, %s39, [#allocation7], 512, 512, 32
    $region13: #{predictor_forward.1} parent=1 // pred_fallthru
      _
    // Predicated region
    $region14: #{predictor_forward.1} parent=1 // pred_check
      _
    $region15: #{predictor_forward.1} parent=1 // pred_check_branch
      %46 = sbr.rel (0) target = $region17
    $region16: #{predictor_forward.1} parent=1 // pred_region
      %47 = dma.done [#allocation4], 32
    $region17: #{predictor_forward.1} parent=1 // pred_fallthru
      _
    // Predicated region
    $region18: #{predictor_forward.1} parent=1 // pred_check
      _
    $region19: #{predictor_forward.1} parent=1 // pred_check_branch
      %49 = sbr.rel (0) target = $region21
    $region20: #{predictor_forward.1} parent=1 // pred_region
      %50 = dma.done [#allocation7], 128
    $region21: #{predictor_forward.1} parent=1 // pred_fallthru
      _
    // Predicated region
    $region22: #{predictor_forward.1} parent=1 // pred_check
      _
    $region23: #{predictor_forward.1} parent=1 // pred_check_branch
      %52 = sbr.rel (0) target = $region25
    $region24: #{predictor_forward.1} parent=1 // pred_region
      %53 = dma.done [#allocation7], 20992
    $region25: #{predictor_forward.1} parent=1 // pred_fallthru
      _
    %v54 = vld [vmem:[#allocation3] sm:$0x3]
    %v55 = vld [vmem:[#allocation8 + $0x18] sm:$0xff]
    %v56 = vld [vmem:[#allocation8 + $0x238] sm:$0x3]
    %58 = vrot.lane.b32.xlu0 %v55, 64
    %v59 = vpop.permute.xlu0 %58
    %62 = vrot.lane.b32.xlu0 %v56, 64
    %v63 = vpop.permute.xlu0 %62
    %vm65 = vcmask 64512
    %v67 = vsel %vm65, %v54, 0
    %69 = vmatprep.subr.mxu0 0.0
    %70 = vmatpush1.msra.mxu0 %v59
    %71 = vmatprep.subr.mxu0 0.0
    %72 = vmatpush1.msra.mxu0 0.0
    %73 = vmatprep.subr.mxu0 0.0
    %74 = vmatpush1.msra.mxu0 0.0
    %75 = vmatprep.subr.mxu0 0.0
    %76 = vmatpush1.msra.mxu0 0.0
    %77 = vmatprep.subr.mxu0 0.0
    %78 = vmatpush1.msra.mxu0 0.0
    %79 = vmatprep.subr.mxu0 0.0
    %80 = vmatpush1.msra.mxu0 0.0
    %81 = vmatprep.subr.mxu0 0.0
    %82 = vmatpush1.msra.mxu0 0.0
    %83 = vmatprep.subr.mxu0 0.0
    %84 = vmatpush1.msra.mxu0 0.0
    %85 = vmatprep.subr.mxu0 0.0
    %86 = vmatpush1.msra.mxu0 0.0
    %87 = vmatprep.subr.mxu0 0.0
    %88 = vmatpush1.msra.mxu0 0.0
    %89 = vmatprep.subr.mxu0 0.0
    %90 = vmatpush1.msra.mxu0 0.0
    %91 = vmatprep.subr.mxu0 0.0
    %92 = vmatpush1.msra.mxu0 0.0
    %93 = vmatprep.subr.mxu0 0.0
    %94 = vmatpush1.msra.mxu0 0.0
    %95 = vmatprep.subr.mxu0 0.0
    %96 = vmatpush1.msra.mxu0 0.0
    %97 = vmatprep.subr.mxu0 0.0
    %98 = vmatpush1.msra.mxu0 0.0
    %99 = vmatprep.subr.mxu0 0.0
    %100 = vmatpush1.msra.mxu0 0.0
    %101 = vmatprep.subr.mxu0 0.0
    %102 = vmatpush1.msra.mxu0 0.0
    %103 = vmatprep.subr.mxu0 0.0
    %104 = vmatpush1.msra.mxu0 0.0
    %105 = vmatprep.subr.mxu0 0.0
    %106 = vmatpush1.msra.mxu0 0.0
    %107 = vmatprep.subr.mxu0 0.0
    %108 = vmatpush1.msra.mxu0 0.0
    %109 = vmatprep.subr.mxu0 0.0
    %110 = vmatpush1.msra.mxu0 0.0
    %111 = vmatprep.subr.mxu0 0.0
    %112 = vmatpush1.msra.mxu0 0.0
    %113 = vmatprep.subr.mxu0 0.0
    %114 = vmatpush1.msra.mxu0 0.0
    %115 = vmatprep.subr.mxu0 0.0
    %116 = vmatpush1.msra.mxu0 0.0
    %117 = vmatprep.subr.mxu0 0.0
    %118 = vmatpush1.msra.mxu0 0.0
    %119 = vmatprep.subr.mxu0 0.0
    %120 = vmatpush1.msra.mxu0 0.0
    %121 = vmatprep.subr.mxu0 0.0
    %122 = vmatpush1.msra.mxu0 0.0
    %123 = vmatprep.subr.mxu0 0.0
    %124 = vmatpush1.msra.mxu0 0.0
    %125 = vmatprep.subr.mxu0 0.0
    %126 = vmatpush1.msra.mxu0 0.0
    %127 = vmatprep.subr.mxu0 0.0
    %128 = vmatpush1.msra.mxu0 0.0
    %129 = vmatprep.subr.mxu0 0.0
    %130 = vmatpush1.msra.mxu0 0.0
    %131 = vmatprep.subr.mxu0 0.0
    %132 = vmatpush1.msra.mxu0 0.0
    %133 = vmatprep.mubr.f32.mxu0 0.0
    %134 = vmatmul.mubr.f32.gmra.mrb[0].mxu0 %v67
    %v135 = vpop.f32.mrb[0].mxu0
    %v136 = vadd.f32 %v63, %v135
    %v137 = vpop.f32.mrb[0].mxu0
    %138 = vdwg.mxu0
    %v139 = vtanh.pop %v136
    %v140 = vld [vmem:[#allocation8 + $0x38] sm:$0xff]
    %v141 = vld [vmem:[#allocation8 + $0x58] sm:$0xff]
    %v142 = vld [vmem:[#allocation8 + $0x78] sm:$0xff]
    %v143 = vld [vmem:[#allocation8 + $0x98] sm:$0xff]
    %v144 = vld [vmem:[#allocation8 + $0x258] sm:$0x3]
    %149 = vrot.lane.b32.xlu0 %v140, 64
    %v150 = vpop.permute.xlu0 %149
    %151 = vrot.lane.b32.xlu0 %v141, 64
    %v152 = vpop.permute.xlu0 %151
    %153 = vrot.lane.b32.xlu0 %v142, 64
    %v154 = vpop.permute.xlu0 %153
    %155 = vrot.lane.b32.xlu0 %v143, 64
    %v156 = vpop.permute.xlu0 %155
    %162 = vrot.lane.b32.xlu0 %v144, 64
    %v163 = vpop.permute.xlu0 %162
    %vm165 = vcmask 261120
    %v167 = vsel %vm165, %v139, 0
    %169 = vmatprep.subr.mxu0 0.0
    %170 = vmatpush1.msra.mxu0 %v150
    %171 = vmatprep.subr.mxu0 0.0
    %172 = vmatpush1.msra.mxu0 %v152
    %173 = vmatprep.subr.mxu0 0.0
    %174 = vmatpush1.msra.mxu0 %v154
    %175 = vmatprep.subr.mxu0 0.0
    %176 = vmatpush1.msra.mxu0 %v156
    %177 = vmatprep.subr.mxu0 0.0
    %178 = vmatpush1.msra.mxu0 0.0
    %179 = vmatprep.subr.mxu0 0.0
    %180 = vmatpush1.msra.mxu0 0.0
    %181 = vmatprep.subr.mxu0 0.0
    %182 = vmatpush1.msra.mxu0 0.0
    %183 = vmatprep.subr.mxu0 0.0
    %184 = vmatpush1.msra.mxu0 0.0
    %185 = vmatprep.subr.mxu0 0.0
    %186 = vmatpush1.msra.mxu0 0.0
    %187 = vmatprep.subr.mxu0 0.0
    %188 = vmatpush1.msra.mxu0 0.0
    %189 = vmatprep.subr.mxu0 0.0
    %190 = vmatpush1.msra.mxu0 0.0
    %191 = vmatprep.subr.mxu0 0.0
    %192 = vmatpush1.msra.mxu0 0.0
    %193 = vmatprep.subr.mxu0 0.0
    %194 = vmatpush1.msra.mxu0 0.0
    %195 = vmatprep.subr.mxu0 0.0
    %196 = vmatpush1.msra.mxu0 0.0
    %197 = vmatprep.subr.mxu0 0.0
    %198 = vmatpush1.msra.mxu0 0.0
    %199 = vmatprep.subr.mxu0 0.0
    %200 = vmatpush1.msra.mxu0 0.0
    %201 = vmatprep.subr.mxu0 0.0
    %202 = vmatpush1.msra.mxu0 0.0
    %203 = vmatprep.subr.mxu0 0.0
    %204 = vmatpush1.msra.mxu0 0.0
    %205 = vmatprep.subr.mxu0 0.0
    %206 = vmatpush1.msra.mxu0 0.0
    %207 = vmatprep.subr.mxu0 0.0
    %208 = vmatpush1.msra.mxu0 0.0
    %209 = vmatprep.subr.mxu0 0.0
    %210 = vmatpush1.msra.mxu0 0.0
    %211 = vmatprep.subr.mxu0 0.0
    %212 = vmatpush1.msra.mxu0 0.0
    %213 = vmatprep.subr.mxu0 0.0
    %214 = vmatpush1.msra.mxu0 0.0
    %215 = vmatprep.subr.mxu0 0.0
    %216 = vmatpush1.msra.mxu0 0.0
    %217 = vmatprep.subr.mxu0 0.0
    %218 = vmatpush1.msra.mxu0 0.0
    %219 = vmatprep.subr.mxu0 0.0
    %220 = vmatpush1.msra.mxu0 0.0
    %221 = vmatprep.subr.mxu0 0.0
    %222 = vmatpush1.msra.mxu0 0.0
    %223 = vmatprep.subr.mxu0 0.0
    %224 = vmatpush1.msra.mxu0 0.0
    %225 = vmatprep.subr.mxu0 0.0
    %226 = vmatpush1.msra.mxu0 0.0
    %227 = vmatprep.subr.mxu0 0.0
    %228 = vmatpush1.msra.mxu0 0.0
    %229 = vmatprep.subr.mxu0 0.0
    %230 = vmatpush1.msra.mxu0 0.0
    %231 = vmatprep.subr.mxu0 0.0
    %232 = vmatpush1.msra.mxu0 0.0
    %233 = vmatprep.mubr.f32.mxu0 0.0
    %234 = vmatmul.mubr.f32.gmra.mrb[0].mxu0 %v167
    %v235 = vpop.f32.mrb[0].mxu0
    %v236 = vadd.f32 %v163, %v235
    %v237 = vpop.f32.mrb[0].mxu0
    %238 = vdwg.mxu0
    %v239 = vtanh.pop %v236
    %v240 = vld [vmem:[#allocation8 + $0xb8] sm:$0xff]
    %v241 = vld [vmem:[#allocation8 + $0xd8] sm:$0xff]
    %v242 = vld [vmem:[#allocation8 + $0xf8] sm:$0xff]
    %v243 = vld [vmem:[#allocation8 + $0x118] sm:$0xff]
    %v244 = vld [vmem:[#allocation8 + $0x278] sm:$0x3]
    %249 = vrot.lane.b32.xlu0 %v240, 64
    %v250 = vpop.permute.xlu0 %249
    %251 = vrot.lane.b32.xlu0 %v241, 64
    %v252 = vpop.permute.xlu0 %251
    %253 = vrot.lane.b32.xlu0 %v242, 64
    %v254 = vpop.permute.xlu0 %253
    %255 = vrot.lane.b32.xlu0 %v243, 64
    %v256 = vpop.permute.xlu0 %255
    %262 = vrot.lane.b32.xlu0 %v244, 64
    %v263 = vpop.permute.xlu0 %262
    %v266 = vsel %vm165, %v239, 0
    %268 = vmatprep.subr.mxu0 0.0
    %269 = vmatpush1.msra.mxu0 %v250
    %270 = vmatprep.subr.mxu0 0.0
    %271 = vmatpush1.msra.mxu0 %v252
    %272 = vmatprep.subr.mxu0 0.0
    %273 = vmatpush1.msra.mxu0 %v254
    %274 = vmatprep.subr.mxu0 0.0
    %275 = vmatpush1.msra.mxu0 %v256
    %276 = vmatprep.subr.mxu0 0.0
    %277 = vmatpush1.msra.mxu0 0.0
    %278 = vmatprep.subr.mxu0 0.0
    %279 = vmatpush1.msra.mxu0 0.0
    %280 = vmatprep.subr.mxu0 0.0
    %281 = vmatpush1.msra.mxu0 0.0
    %282 = vmatprep.subr.mxu0 0.0
    %283 = vmatpush1.msra.mxu0 0.0
    %284 = vmatprep.subr.mxu0 0.0
    %285 = vmatpush1.msra.mxu0 0.0
    %286 = vmatprep.subr.mxu0 0.0
    %287 = vmatpush1.msra.mxu0 0.0
    %288 = vmatprep.subr.mxu0 0.0
    %289 = vmatpush1.msra.mxu0 0.0
    %290 = vmatprep.subr.mxu0 0.0
    %291 = vmatpush1.msra.mxu0 0.0
    %292 = vmatprep.subr.mxu0 0.0
    %293 = vmatpush1.msra.mxu0 0.0
    %294 = vmatprep.subr.mxu0 0.0
    %295 = vmatpush1.msra.mxu0 0.0
    %296 = vmatprep.subr.mxu0 0.0
    %297 = vmatpush1.msra.mxu0 0.0
    %298 = vmatprep.subr.mxu0 0.0
    %299 = vmatpush1.msra.mxu0 0.0
    %300 = vmatprep.subr.mxu0 0.0
    %301 = vmatpush1.msra.mxu0 0.0
    %302 = vmatprep.subr.mxu0 0.0
    %303 = vmatpush1.msra.mxu0 0.0
    %304 = vmatprep.subr.mxu0 0.0
    %305 = vmatpush1.msra.mxu0 0.0
    %306 = vmatprep.subr.mxu0 0.0
    %307 = vmatpush1.msra.mxu0 0.0
    %308 = vmatprep.subr.mxu0 0.0
    %309 = vmatpush1.msra.mxu0 0.0
    %310 = vmatprep.subr.mxu0 0.0
    %311 = vmatpush1.msra.mxu0 0.0
    %312 = vmatprep.subr.mxu0 0.0
    %313 = vmatpush1.msra.mxu0 0.0
    %314 = vmatprep.subr.mxu0 0.0
    %315 = vmatpush1.msra.mxu0 0.0
    %316 = vmatprep.subr.mxu0 0.0
    %317 = vmatpush1.msra.mxu0 0.0
    %318 = vmatprep.subr.mxu0 0.0
    %319 = vmatpush1.msra.mxu0 0.0
    %320 = vmatprep.subr.mxu0 0.0
    %321 = vmatpush1.msra.mxu0 0.0
    %322 = vmatprep.subr.mxu0 0.0
    %323 = vmatpush1.msra.mxu0 0.0
    %324 = vmatprep.subr.mxu0 0.0
    %325 = vmatpush1.msra.mxu0 0.0
    %326 = vmatprep.subr.mxu0 0.0
    %327 = vmatpush1.msra.mxu0 0.0
    %328 = vmatprep.subr.mxu0 0.0
    %329 = vmatpush1.msra.mxu0 0.0
    %330 = vmatprep.subr.mxu0 0.0
    %331 = vmatpush1.msra.mxu0 0.0
    %332 = vmatprep.mubr.f32.mxu0 0.0
    %333 = vmatmul.mubr.f32.gmra.mrb[0].mxu0 %v266
    %v334 = vpop.f32.mrb[0].mxu0
    %v335 = vadd.f32 %v263, %v334
    %v336 = vpop.f32.mrb[0].mxu0
    %337 = vdwg.mxu0
    %v338 = vld [vmem:[#allocation6] sm:$0x1]
    %vm339 = vcmask 122880
    %340 = vst.msk [vmem:[#allocation2] sm:$0x1] %vm339, %v338
    %v341 = vld [vmem:[#allocation6 + $0x1] sm:$0x1]
    %343 = vrot.lane.b32.xlu0 %v341, 16
    %v344 = vpop.permute.xlu0 %343
    %vm346 = vcmask 254080
    %347 = vst.msk [vmem:[#allocation2] sm:$0x1] %vm346, %v344
    %v348 = vld [vmem:[#allocation6 + $0x2] sm:$0x1]
    %350 = vrot.lane.b32.xlu0 %v348, 32
    %v351 = vpop.permute.xlu0 %350
    %vm353 = vcmask 385280
    %354 = vst.msk [vmem:[#allocation2] sm:$0x1] %vm353, %v351
    %v355 = vld [vmem:[#allocation6 + $0x3] sm:$0x1]
    %357 = vrot.lane.b32.xlu0 %v355, 48
    %v358 = vpop.permute.xlu0 %357
    %vm360 = vcmask 516480
    %361 = vst.msk [vmem:[#allocation2] sm:$0x1] %vm360, %v358
    %s362 = scalar_lea.vmem [#allocation6], 4
    %v363 = vld [vmem:[%s362] sm:$0x1]
    %364 = vst.msk [vmem:[#allocation2 + $0x1] sm:$0x1] %vm339, %v363
    %v365 = vld [vmem:[%s362 + $0x1] sm:$0x1]
    %367 = vrot.lane.b32.xlu0 %v365, 16
    %v368 = vpop.permute.xlu0 %367
    %370 = vst.msk [vmem:[#allocation2 + $0x1] sm:$0x1] %vm346, %v368
    %v371 = vld [vmem:[%s362 + $0x2] sm:$0x1]
    %373 = vrot.lane.b32.xlu0 %v371, 32
    %v374 = vpop.permute.xlu0 %373
    %376 = vst.msk [vmem:[#allocation2 + $0x1] sm:$0x1] %vm353, %v374
    %v377 = vld [vmem:[%s362 + $0x3] sm:$0x1]
    %379 = vrot.lane.b32.xlu0 %v377, 48
    %v380 = vpop.permute.xlu0 %379
    %382 = vst.msk [vmem:[#allocation2 + $0x1] sm:$0x1] %vm360, %v380
    %v383 = vld [vmem:[#allocation2] sm:$0x3]
    %v384 = vld [vmem:[#allocation8 + $0x400] sm:$0xff]
    %v385 = vld [vmem:[#allocation8 + $0x408] sm:$0xff]
    %v386 = vld [vmem:[#allocation8 + $0x420] sm:$0xff]
    %v387 = vld [vmem:[#allocation8 + $0x428] sm:$0xff]
    %v388 = vld [vmem:[#allocation8 + $0x440] sm:$0xff]
    %v389 = vld [vmem:[#allocation8 + $0x448] sm:$0xff]
    %v390 = vld [vmem:[#allocation8 + $0x460] sm:$0xff]
    %v391 = vld [vmem:[#allocation8 + $0x468] sm:$0xff]
    %v392 = vld [vmem:[#allocation8 + $0x480] sm:$0xff]
    %v393 = vld [vmem:[#allocation8 + $0x488] sm:$0xff]
    %v394 = vld [vmem:[#allocation8 + $0x4a0] sm:$0xff]
    %v395 = vld [vmem:[#allocation8 + $0x4a8] sm:$0xff]
    %v396 = vld [vmem:[#allocation8 + $0x4c0] sm:$0xff]
    %v397 = vld [vmem:[#allocation8 + $0x4c8] sm:$0xff]
    %v398 = vld [vmem:[#allocation8 + $0x4e0] sm:$0xff]
    %v399 = vld [vmem:[#allocation8 + $0x4e8] sm:$0xff]
    %v400 = vld [vmem:[#allocation8 + $0x410] sm:$0x3]
    %v401 = vld [vmem:[#allocation8 + $0x418] sm:$0x3]
    %vm402 = vcmask 523264
    %v404 = vsel %vm402, %v383, 0
    %406 = vmatprep.subr.mxu0 %v385
    %407 = vmatpush1.msra.mxu0 %v384
    %408 = vmatprep.subr.mxu0 %v387
    %409 = vmatpush1.msra.mxu0 %v386
    %410 = vmatprep.subr.mxu0 %v389
    %411 = vmatpush1.msra.mxu0 %v388
    %412 = vmatprep.subr.mxu0 %v391
    %413 = vmatpush1.msra.mxu0 %v390
    %414 = vmatprep.subr.mxu0 %v393
    %415 = vmatpush1.msra.mxu0 %v392
    %416 = vmatprep.subr.mxu0 %v395
    %417 = vmatpush1.msra.mxu0 %v394
    %418 = vmatprep.subr.mxu0 %v397
    %419 = vmatpush1.msra.mxu0 %v396
    %420 = vmatprep.subr.mxu0 %v399
    %421 = vmatpush1.msra.mxu0 %v398
    %422 = vmatprep.subr.mxu0 0.0
    %423 = vmatpush1.msra.mxu0 0.0
    %424 = vmatprep.subr.mxu0 0.0
    %425 = vmatpush1.msra.mxu0 0.0
    %426 = vmatprep.subr.mxu0 0.0
    %427 = vmatpush1.msra.mxu0 0.0
    %428 = vmatprep.subr.mxu0 0.0
    %429 = vmatpush1.msra.mxu0 0.0
    %430 = vmatprep.subr.mxu0 0.0
    %431 = vmatpush1.msra.mxu0 0.0
    %432 = vmatprep.subr.mxu0 0.0
    %433 = vmatpush1.msra.mxu0 0.0
    %434 = vmatprep.subr.mxu0 0.0
    %435 = vmatpush1.msra.mxu0 0.0
    %436 = vmatprep.subr.mxu0 0.0
    %437 = vmatpush1.msra.mxu0 0.0
    %438 = vmatprep.subr.mxu0 0.0
    %439 = vmatpush1.msra.mxu0 0.0
    %440 = vmatprep.subr.mxu0 0.0
    %441 = vmatpush1.msra.mxu0 0.0
    %442 = vmatprep.subr.mxu0 0.0
    %443 = vmatpush1.msra.mxu0 0.0
    %444 = vmatprep.subr.mxu0 0.0
    %445 = vmatpush1.msra.mxu0 0.0
    %446 = vmatprep.subr.mxu0 0.0
    %447 = vmatpush1.msra.mxu0 0.0
    %448 = vmatprep.subr.mxu0 0.0
    %449 = vmatpush1.msra.mxu0 0.0
    %450 = vmatprep.subr.mxu0 0.0
    %451 = vmatpush1.msra.mxu0 0.0
    %452 = vmatprep.subr.mxu0 0.0
    %453 = vmatpush1.msra.mxu0 0.0
    %454 = vmatprep.subr.mxu0 0.0
    %455 = vmatpush1.msra.mxu0 0.0
    %456 = vmatprep.subr.mxu0 0.0
    %457 = vmatpush1.msra.mxu0 0.0
    %458 = vmatprep.subr.mxu0 0.0
    %459 = vmatpush1.msra.mxu0 0.0
    %460 = vmatprep.subr.mxu0 0.0
    %461 = vmatpush1.msra.mxu0 0.0
    %462 = vmatprep.subr.mxu0 0.0
    %463 = vmatpush1.msra.mxu0 0.0
    %464 = vmatprep.subr.mxu0 0.0
    %465 = vmatpush1.msra.mxu0 0.0
    %466 = vmatprep.subr.mxu0 0.0
    %467 = vmatpush1.msra.mxu0 0.0
    %468 = vmatprep.subr.mxu0 0.0
    %469 = vmatpush1.msra.mxu0 0.0
    %470 = vmatprep.mubr.f32.mxu0 0.0
    %471 = vmatmul.mubr.f32.gmra.mrb[0].mxu0 %v404
    %v472 = vpop.f32.mrb[0].mxu0
    %v473 = vadd.f32 %v400, %v472
    %v474 = vpop.f32.mrb[0].mxu0
    %v475 = vadd.f32 %v401, %v474
    %476 = vdwg.mxu0
    %v477 = vmax.f32 %v473, 0.0
    %v478 = vmax.f32 %v475, 0.0
    %v479 = vld [vmem:[#allocation8] sm:$0xff]
    %v480 = vld [vmem:[#allocation8 + $0x8] sm:$0xff]
    %v481 = vld [vmem:[#allocation8 + $0x10] sm:$0xff]
    %v482 = vld [vmem:[#allocation8 + $0x18] sm:$0xff]
    %v483 = vld [vmem:[#allocation8 + $0x20] sm:$0xff]
    %v484 = vld [vmem:[#allocation8 + $0x28] sm:$0xff]
    %v485 = vld [vmem:[#allocation8 + $0x30] sm:$0xff]
    %v486 = vld [vmem:[#allocation8 + $0x38] sm:$0xff]
    %v487 = vld [vmem:[#allocation8 + $0x40] sm:$0xff]
    %v488 = vld [vmem:[#allocation8 + $0x48] sm:$0xff]
    %v489 = vld [vmem:[#allocation8 + $0x50] sm:$0xff]
    %v490 = vld [vmem:[#allocation8 + $0x58] sm:$0xff]
    %v491 = vld [vmem:[#allocation8 + $0x60] sm:$0xff]
    %v492 = vld [vmem:[#allocation8 + $0x68] sm:$0xff]
    %v493 = vld [vmem:[#allocation8 + $0x70] sm:$0xff]
    %v494 = vld [vmem:[#allocation8 + $0x78] sm:$0xff]
    %v495 = vld [vmem:[#allocation8 + $0x80] sm:$0xff]
    %v496 = vld [vmem:[#allocation8 + $0x88] sm:$0xff]
    %v497 = vld [vmem:[#allocation8 + $0x90] sm:$0xff]
    %v498 = vld [vmem:[#allocation8 + $0x98] sm:$0xff]
    %v499 = vld [vmem:[#allocation8 + $0xa0] sm:$0xff]
    %v500 = vld [vmem:[#allocation8 + $0xa8] sm:$0xff]
    %v501 = vld [vmem:[#allocation8 + $0xb0] sm:$0xff]
    %v502 = vld [vmem:[#allocation8 + $0xb8] sm:$0xff]
    %v503 = vld [vmem:[#allocation8 + $0xc0] sm:$0xff]
    %v504 = vld [vmem:[#allocation8 + $0xc8] sm:$0xff]
    %v505 = vld [vmem:[#allocation8 + $0xd0] sm:$0xff]
    %v506 = vld [vmem:[#allocation8 + $0xd8] sm:$0xff]
    %v507 = vld [vmem:[#allocation8 + $0xe0] sm:$0xff]
    %v508 = vld [vmem:[#allocation8 + $0xe8] sm:$0xff]
    %v509 = vld [vmem:[#allocation8 + $0xf0] sm:$0xff]
    %v510 = vld [vmem:[#allocation8 + $0xf8] sm:$0xff]
    %v511 = vld [vmem:[#allocation8 + $0x100] sm:$0xff]
    %v512 = vld [vmem:[#allocation8 + $0x108] sm:$0xff]
    %v513 = vld [vmem:[#allocation8 + $0x110] sm:$0xff]
    %v514 = vld [vmem:[#allocation8 + $0x118] sm:$0xff]
    %v515 = vld [vmem:[#allocation8 + $0x120] sm:$0xff]
    %v516 = vld [vmem:[#allocation8 + $0x128] sm:$0xff]
    %v517 = vld [vmem:[#allocation8 + $0x130] sm:$0xff]
    %v518 = vld [vmem:[#allocation8 + $0x138] sm:$0xff]
    %v519 = vld [vmem:[#allocation8 + $0x140] sm:$0xff]
    %v520 = vld [vmem:[#allocation8 + $0x148] sm:$0xff]
    %v521 = vld [vmem:[#allocation8 + $0x150] sm:$0xff]
    %v522 = vld [vmem:[#allocation8 + $0x158] sm:$0xff]
    %v523 = vld [vmem:[#allocation8 + $0x160] sm:$0xff]
    %v524 = vld [vmem:[#allocation8 + $0x168] sm:$0xff]
    %v525 = vld [vmem:[#allocation8 + $0x170] sm:$0xff]
    %v526 = vld [vmem:[#allocation8 + $0x178] sm:$0xff]
    %v527 = vld [vmem:[#allocation8 + $0x180] sm:$0xff]
    %v528 = vld [vmem:[#allocation8 + $0x188] sm:$0xff]
    %v529 = vld [vmem:[#allocation8 + $0x190] sm:$0xff]
    %v530 = vld [vmem:[#allocation8 + $0x198] sm:$0xff]
    %v531 = vld [vmem:[#allocation8 + $0x1a0] sm:$0xff]
    %v532 = vld [vmem:[#allocation8 + $0x1a8] sm:$0xff]
    %v533 = vld [vmem:[#allocation8 + $0x1b0] sm:$0xff]
    %v534 = vld [vmem:[#allocation8 + $0x1b8] sm:$0xff]
    %v535 = vld [vmem:[#allocation8 + $0x1c0] sm:$0xff]
    %v536 = vld [vmem:[#allocation8 + $0x1c8] sm:$0xff]
    %v537 = vld [vmem:[#allocation8 + $0x1d0] sm:$0xff]
    %v538 = vld [vmem:[#allocation8 + $0x1d8] sm:$0xff]
    %v539 = vld [vmem:[#allocation8 + $0x1e0] sm:$0xff]
    %v540 = vld [vmem:[#allocation8 + $0x1e8] sm:$0xff]
    %v541 = vld [vmem:[#allocation8 + $0x1f0] sm:$0xff]
    %v542 = vld [vmem:[#allocation8 + $0x1f8] sm:$0xff]
    %v543 = vld [vmem:[#allocation8 + $0x200] sm:$0xff]
    %v544 = vld [vmem:[#allocation8 + $0x208] sm:$0xff]
    %v545 = vld [vmem:[#allocation8 + $0x210] sm:$0xff]
    %v546 = vld [vmem:[#allocation8 + $0x218] sm:$0xff]
    %v547 = vld [vmem:[#allocation8 + $0x220] sm:$0xff]
    %v548 = vld [vmem:[#allocation8 + $0x228] sm:$0xff]
    %v549 = vld [vmem:[#allocation8 + $0x230] sm:$0xff]
    %v550 = vld [vmem:[#allocation8 + $0x238] sm:$0xff]
    %v551 = vld [vmem:[#allocation8 + $0x240] sm:$0xff]
    %v552 = vld [vmem:[#allocation8 + $0x248] sm:$0xff]
    %v553 = vld [vmem:[#allocation8 + $0x250] sm:$0xff]
    %v554 = vld [vmem:[#allocation8 + $0x258] sm:$0xff]
    %v555 = vld [vmem:[#allocation8 + $0x260] sm:$0xff]
    %v556 = vld [vmem:[#allocation8 + $0x268] sm:$0xff]
    %v557 = vld [vmem:[#allocation8 + $0x270] sm:$0xff]
    %v558 = vld [vmem:[#allocation8 + $0x278] sm:$0xff]
    %v559 = vld [vmem:[#allocation8 + $0x280] sm:$0xff]
    %v560 = vld [vmem:[#allocation8 + $0x288] sm:$0xff]
    %v561 = vld [vmem:[#allocation8 + $0x290] sm:$0xff]
    %v562 = vld [vmem:[#allocation8 + $0x298] sm:$0xff]
    %v563 = vld [vmem:[#allocation8 + $0x2a0] sm:$0xff]
    %v564 = vld [vmem:[#allocation8 + $0x2a8] sm:$0xff]
    %v565 = vld [vmem:[#allocation8 + $0x2b0] sm:$0xff]
    %v566 = vld [vmem:[#allocation8 + $0x2b8] sm:$0xff]
    %v567 = vld [vmem:[#allocation8 + $0x2c0] sm:$0xff]
    %v568 = vld [vmem:[#allocation8 + $0x2c8] sm:$0xff]
    %v569 = vld [vmem:[#allocation8 + $0x2d0] sm:$0xff]
    %v570 = vld [vmem:[#allocation8 + $0x2d8] sm:$0xff]
    %v571 = vld [vmem:[#allocation8 + $0x2e0] sm:$0xff]
    %v572 = vld [vmem:[#allocation8 + $0x2e8] sm:$0xff]
    %v573 = vld [vmem:[#allocation8 + $0x2f0] sm:$0xff]
    %v574 = vld [vmem:[#allocation8 + $0x2f8] sm:$0xff]
    %v575 = vld [vmem:[#allocation8 + $0x300] sm:$0xff]
    %v576 = vld [vmem:[#allocation8 + $0x308] sm:$0xff]
    %v577 = vld [vmem:[#allocation8 + $0x310] sm:$0xff]
    %v578 = vld [vmem:[#allocation8 + $0x318] sm:$0xff]
    %v579 = vld [vmem:[#allocation8 + $0x320] sm:$0xff]
    %v580 = vld [vmem:[#allocation8 + $0x328] sm:$0xff]
    %v581 = vld [vmem:[#allocation8 + $0x330] sm:$0xff]
    %v582 = vld [vmem:[#allocation8 + $0x338] sm:$0xff]
    %v583 = vld [vmem:[#allocation8 + $0x340] sm:$0xff]
    %v584 = vld [vmem:[#allocation8 + $0x348] sm:$0xff]
    %v585 = vld [vmem:[#allocation8 + $0x350] sm:$0xff]
    %v586 = vld [vmem:[#allocation8 + $0x358] sm:$0xff]
    %v587 = vld [vmem:[#allocation8 + $0x360] sm:$0xff]
    %v588 = vld [vmem:[#allocation8 + $0x368] sm:$0xff]
    %v589 = vld [vmem:[#allocation8 + $0x370] sm:$0xff]
    %v590 = vld [vmem:[#allocation8 + $0x378] sm:$0xff]
    %v591 = vld [vmem:[#allocation8 + $0x380] sm:$0xff]
    %v592 = vld [vmem:[#allocation8 + $0x388] sm:$0xff]
    %v593 = vld [vmem:[#allocation8 + $0x390] sm:$0xff]
    %v594 = vld [vmem:[#allocation8 + $0x398] sm:$0xff]
    %v595 = vld [vmem:[#allocation8 + $0x3a0] sm:$0xff]
    %v596 = vld [vmem:[#allocation8 + $0x3a8] sm:$0xff]
    %v597 = vld [vmem:[#allocation8 + $0x3b0] sm:$0xff]
    %v598 = vld [vmem:[#allocation8 + $0x3b8] sm:$0xff]
    %v599 = vld [vmem:[#allocation8 + $0x3c0] sm:$0xff]
    %v600 = vld [vmem:[#allocation8 + $0x3c8] sm:$0xff]
    %v601 = vld [vmem:[#allocation8 + $0x3d0] sm:$0xff]
    %v602 = vld [vmem:[#allocation8 + $0x3d8] sm:$0xff]
    %v603 = vld [vmem:[#allocation8 + $0x3e0] sm:$0xff]
    %v604 = vld [vmem:[#allocation8 + $0x3e8] sm:$0xff]
    %v605 = vld [vmem:[#allocation8 + $0x3f0] sm:$0xff]
    %v606 = vld [vmem:[#allocation8 + $0x3f8] sm:$0xff]
    %v607 = vld [vmem:[#allocation8 + $0x500] sm:$0x3]
    %v608 = vld [vmem:[#allocation8 + $0x508] sm:$0x3]
    %v609 = vld [vmem:[#allocation8 + $0x510] sm:$0x3]
    %v610 = vld [vmem:[#allocation8 + $0x518] sm:$0x3]
    %611 = vmatprep.subr.mxu0 %v480
    %612 = vmatpush1.msra.mxu0 %v479
    %613 = vmatprep.subr.mxu0 %v484
    %614 = vmatpush1.msra.mxu0 %v483
    %615 = vmatprep.subr.mxu0 %v488
    %616 = vmatpush1.msra.mxu0 %v487
    %617 = vmatprep.subr.mxu0 %v492
    %618 = vmatpush1.msra.mxu0 %v491
    %619 = vmatprep.subr.mxu0 %v496
    %620 = vmatpush1.msra.mxu0 %v495
    %621 = vmatprep.subr.mxu0 %v500
    %622 = vmatpush1.msra.mxu0 %v499
    %623 = vmatprep.subr.mxu0 %v504
    %624 = vmatpush1.msra.mxu0 %v503
    %625 = vmatprep.subr.mxu0 %v508
    %626 = vmatpush1.msra.mxu0 %v507
    %627 = vmatprep.subr.mxu0 %v512
    %628 = vmatpush1.msra.mxu0 %v511
    %629 = vmatprep.subr.mxu0 %v516
    %630 = vmatpush1.msra.mxu0 %v515
    %631 = vmatprep.subr.mxu0 %v520
    %632 = vmatpush1.msra.mxu0 %v519
    %633 = vmatprep.subr.mxu0 %v524
    %634 = vmatpush1.msra.mxu0 %v523
    %635 = vmatprep.subr.mxu0 %v528
    %636 = vmatpush1.msra.mxu0 %v527
    %637 = vmatprep.subr.mxu0 %v532
    %638 = vmatpush1.msra.mxu0 %v531
    %639 = vmatprep.subr.mxu0 %v536
    %640 = vmatpush1.msra.mxu0 %v535
    %641 = vmatprep.subr.mxu0 %v540
    %642 = vmatpush1.msra.mxu0 %v539
    %643 = vmatprep.subr.mxu0 %v544
    %644 = vmatpush1.msra.mxu0 %v543
    %645 = vmatprep.subr.mxu0 %v548
    %646 = vmatpush1.msra.mxu0 %v547
    %647 = vmatprep.subr.mxu0 %v552
    %648 = vmatpush1.msra.mxu0 %v551
    %649 = vmatprep.subr.mxu0 %v556
    %650 = vmatpush1.msra.mxu0 %v555
    %651 = vmatprep.subr.mxu0 %v560
    %652 = vmatpush1.msra.mxu0 %v559
    %653 = vmatprep.subr.mxu0 %v564
    %654 = vmatpush1.msra.mxu0 %v563
    %655 = vmatprep.subr.mxu0 %v568
    %656 = vmatpush1.msra.mxu0 %v567
    %657 = vmatprep.subr.mxu0 %v572
    %658 = vmatpush1.msra.mxu0 %v571
    %659 = vmatprep.subr.mxu0 %v576
    %660 = vmatpush1.msra.mxu0 %v575
    %661 = vmatprep.subr.mxu0 %v580
    %662 = vmatpush1.msra.mxu0 %v579
    %663 = vmatprep.subr.mxu0 %v584
    %664 = vmatpush1.msra.mxu0 %v583
    %665 = vmatprep.subr.mxu0 %v588
    %666 = vmatpush1.msra.mxu0 %v587
    %667 = vmatprep.subr.mxu0 %v592
    %668 = vmatpush1.msra.mxu0 %v591
    %669 = vmatprep.subr.mxu0 %v596
    %670 = vmatpush1.msra.mxu0 %v595
    %671 = vmatprep.subr.mxu0 %v600
    %672 = vmatpush1.msra.mxu0 %v599
    %673 = vmatprep.subr.mxu0 %v604
    %674 = vmatpush1.msra.mxu0 %v603
    %675 = vmatprep.mubr.f32.mxu0 %v478
    %676 = vmatmul.mubr.f32.gmra.mrb[0].mxu0 %v477
    %v677 = vpop.f32.mrb[0].mxu0
    %v678 = vadd.f32 %v607, %v677
    %v679 = vpop.f32.mrb[0].mxu0
    %v680 = vadd.f32 %v608, %v679
    %681 = vdwg.mxu0
    %682 = vmatprep.subr.mxu0 %v482
    %683 = vmatpush1.msra.mxu0 %v481
    %684 = vmatprep.subr.mxu0 %v486
    %685 = vmatpush1.msra.mxu0 %v485
    %686 = vmatprep.subr.mxu0 %v490
    %687 = vmatpush1.msra.mxu0 %v489
    %688 = vmatprep.subr.mxu0 %v494
    %689 = vmatpush1.msra.mxu0 %v493
    %690 = vmatprep.subr.mxu0 %v498
    %691 = vmatpush1.msra.mxu0 %v497
    %692 = vmatprep.subr.mxu0 %v502
    %693 = vmatpush1.msra.mxu0 %v501
    %694 = vmatprep.subr.mxu0 %v506
    %695 = vmatpush1.msra.mxu0 %v505
    %696 = vmatprep.subr.mxu0 %v510
    %697 = vmatpush1.msra.mxu0 %v509
    %698 = vmatprep.subr.mxu0 %v514
    %699 = vmatpush1.msra.mxu0 %v513
    %700 = vmatprep.subr.mxu0 %v518
    %701 = vmatpush1.msra.mxu0 %v517
    %702 = vmatprep.subr.mxu0 %v522
    %703 = vmatpush1.msra.mxu0 %v521
    %704 = vmatprep.subr.mxu0 %v526
    %705 = vmatpush1.msra.mxu0 %v525
    %706 = vmatprep.subr.mxu0 %v530
    %707 = vmatpush1.msra.mxu0 %v529
    %708 = vmatprep.subr.mxu0 %v534
    %709 = vmatpush1.msra.mxu0 %v533
    %710 = vmatprep.subr.mxu0 %v538
    %711 = vmatpush1.msra.mxu0 %v537
    %712 = vmatprep.subr.mxu0 %v542
    %713 = vmatpush1.msra.mxu0 %v541
    %714 = vmatprep.subr.mxu0 %v546
    %715 = vmatpush1.msra.mxu0 %v545
    %716 = vmatprep.subr.mxu0 %v550
    %717 = vmatpush1.msra.mxu0 %v549
    %718 = vmatprep.subr.mxu0 %v554
    %719 = vmatpush1.msra.mxu0 %v553
    %720 = vmatprep.subr.mxu0 %v558
    %721 = vmatpush1.msra.mxu0 %v557
    %722 = vmatprep.subr.mxu0 %v562
    %723 = vmatpush1.msra.mxu0 %v561
    %724 = vmatprep.subr.mxu0 %v566
    %725 = vmatpush1.msra.mxu0 %v565
    %726 = vmatprep.subr.mxu0 %v570
    %727 = vmatpush1.msra.mxu0 %v569
    %728 = vmatprep.subr.mxu0 %v574
    %729 = vmatpush1.msra.mxu0 %v573
    %730 = vmatprep.subr.mxu0 %v578
    %731 = vmatpush1.msra.mxu0 %v577
    %732 = vmatprep.subr.mxu0 %v582
    %733 = vmatpush1.msra.mxu0 %v581
    %734 = vmatprep.subr.mxu0 %v586
    %735 = vmatpush1.msra.mxu0 %v585
    %736 = vmatprep.subr.mxu0 %v590
    %737 = vmatpush1.msra.mxu0 %v589
    %738 = vmatprep.subr.mxu0 %v594
    %739 = vmatpush1.msra.mxu0 %v593
    %740 = vmatprep.subr.mxu0 %v598
    %741 = vmatpush1.msra.mxu0 %v597
    %742 = vmatprep.subr.mxu0 %v602
    %743 = vmatpush1.msra.mxu0 %v601
    %744 = vmatprep.subr.mxu0 %v606
    %745 = vmatpush1.msra.mxu0 %v605
    %746 = vmatprep.mubr.f32.mxu0 %v478
    %747 = vmatmul.mubr.f32.gmra.mrb[0].mxu0 %v477
    %v748 = vpop.f32.mrb[0].mxu0
    %v749 = vadd.f32 %v609, %v748
    %v750 = vpop.f32.mrb[0].mxu0
    %v751 = vadd.f32 %v610, %v750
    %752 = vdwg.mxu0
    %v753 = vmax.f32 %v678, 0.0
    %v754 = vmax.f32 %v680, 0.0
    %v755 = vmax.f32 %v749, 0.0
    %v756 = vmax.f32 %v751, 0.0
    %758 = vrot.lane.b32.xlu0 %v753, 96
    %v759 = vpop.permute.xlu0 %758
    %v761 = vadd.f32 %v753, %v759
    %762 = vrot.lane.b32.xlu0 %v753, 64
    %v763 = vpop.permute.xlu0 %762
    %v765 = vadd.f32 %v761, %v763
    %766 = vrot.lane.b32.xlu0 %v753, 32
    %v767 = vpop.permute.xlu0 %766
    %v769 = vadd.f32 %v765, %v767
    %v770 = vadd.f32 %v769, %v754
    %772 = vrot.lane.b32.xlu0 %v754, 96
    %v773 = vpop.permute.xlu0 %772
    %v775 = vadd.f32 %v770, %v773
    %776 = vrot.lane.b32.xlu0 %v754, 64
    %v777 = vpop.permute.xlu0 %776
    %v779 = vadd.f32 %v775, %v777
    %780 = vrot.lane.b32.xlu0 %v754, 32
    %v781 = vpop.permute.xlu0 %780
    %v783 = vadd.f32 %v779, %v781
    %v784 = vadd.f32 %v783, %v755
    %786 = vrot.lane.b32.xlu0 %v755, 96
    %v787 = vpop.permute.xlu0 %786
    %v789 = vadd.f32 %v784, %v787
    %790 = vrot.lane.b32.xlu0 %v755, 64
    %v791 = vpop.permute.xlu0 %790
    %v793 = vadd.f32 %v789, %v791
    %794 = vrot.lane.b32.xlu0 %v755, 32
    %v795 = vpop.permute.xlu0 %794
    %v797 = vadd.f32 %v793, %v795
    %v798 = vadd.f32 %v797, %v756
    %800 = vrot.lane.b32.xlu0 %v756, 96
    %v801 = vpop.permute.xlu0 %800
    %v803 = vadd.f32 %v798, %v801
    %v804 = vld [vmem:[#allocation8 + $0x138] sm:$0xff]
    %v805 = vld [vmem:[#allocation8 + $0x158] sm:$0xff]
    %v806 = vld [vmem:[#allocation8 + $0x178] sm:$0xff]
    %v807 = vld [vmem:[#allocation8 + $0x198] sm:$0xff]
    %v808 = vld [vmem:[#allocation8 + $0x298] sm:$0x3]
    %813 = vrot.lane.b32.xlu0 %v804, 64
    %v814 = vpop.permute.xlu0 %813
    %815 = vrot.lane.b32.xlu0 %v805, 64
    %v816 = vpop.permute.xlu0 %815
    %817 = vrot.lane.b32.xlu0 %v806, 64
    %v818 = vpop.permute.xlu0 %817
    %819 = vrot.lane.b32.xlu0 %v807, 64
    %v820 = vpop.permute.xlu0 %819
    %826 = vrot.lane.b32.xlu0 %v808, 64
    %v827 = vpop.permute.xlu0 %826
    %v830 = vsel %vm165, %v803, 0
    %832 = vmatprep.subr.mxu0 0.0
    %833 = vmatpush1.msra.mxu0 %v814
    %834 = vmatprep.subr.mxu0 0.0
    %835 = vmatpush1.msra.mxu0 %v816
    %836 = vmatprep.subr.mxu0 0.0
    %837 = vmatpush1.msra.mxu0 %v818
    %838 = vmatprep.subr.mxu0 0.0
    %839 = vmatpush1.msra.mxu0 %v820
    %840 = vmatprep.subr.mxu0 0.0
    %841 = vmatpush1.msra.mxu0 0.0
    %842 = vmatprep.subr.mxu0 0.0
    %843 = vmatpush1.msra.mxu0 0.0
    %844 = vmatprep.subr.mxu0 0.0
    %845 = vmatpush1.msra.mxu0 0.0
    %846 = vmatprep.subr.mxu0 0.0
    %847 = vmatpush1.msra.mxu0 0.0
    %848 = vmatprep.subr.mxu0 0.0
    %849 = vmatpush1.msra.mxu0 0.0
    %850 = vmatprep.subr.mxu0 0.0
    %851 = vmatpush1.msra.mxu0 0.0
    %852 = vmatprep.subr.mxu0 0.0
    %853 = vmatpush1.msra.mxu0 0.0
    %854 = vmatprep.subr.mxu0 0.0
    %855 = vmatpush1.msra.mxu0 0.0
    %856 = vmatprep.subr.mxu0 0.0
    %857 = vmatpush1.msra.mxu0 0.0
    %858 = vmatprep.subr.mxu0 0.0
    %859 = vmatpush1.msra.mxu0 0.0
    %860 = vmatprep.subr.mxu0 0.0
    %861 = vmatpush1.msra.mxu0 0.0
    %862 = vmatprep.subr.mxu0 0.0
    %863 = vmatpush1.msra.mxu0 0.0
    %864 = vmatprep.subr.mxu0 0.0
    %865 = vmatpush1.msra.mxu0 0.0
    %866 = vmatprep.subr.mxu0 0.0
    %867 = vmatpush1.msra.mxu0 0.0
    %868 = vmatprep.subr.mxu0 0.0
    %869 = vmatpush1.msra.mxu0 0.0
    %870 = vmatprep.subr.mxu0 0.0
    %871 = vmatpush1.msra.mxu0 0.0
    %872 = vmatprep.subr.mxu0 0.0
    %873 = vmatpush1.msra.mxu0 0.0
    %874 = vmatprep.subr.mxu0 0.0
    %875 = vmatpush1.msra.mxu0 0.0
    %876 = vmatprep.subr.mxu0 0.0
    %877 = vmatpush1.msra.mxu0 0.0
    %878 = vmatprep.subr.mxu0 0.0
    %879 = vmatpush1.msra.mxu0 0.0
    %880 = vmatprep.subr.mxu0 0.0
    %881 = vmatpush1.msra.mxu0 0.0
    %882 = vmatprep.subr.mxu0 0.0
    %883 = vmatpush1.msra.mxu0 0.0
    %884 = vmatprep.subr.mxu0 0.0
    %885 = vmatpush1.msra.mxu0 0.0
    %886 = vmatprep.subr.mxu0 0.0
    %887 = vmatpush1.msra.mxu0 0.0
    %888 = vmatprep.subr.mxu0 0.0
    %889 = vmatpush1.msra.mxu0 0.0
    %890 = vmatprep.subr.mxu0 0.0
    %891 = vmatpush1.msra.mxu0 0.0
    %892 = vmatprep.subr.mxu0 0.0
    %893 = vmatpush1.msra.mxu0 0.0
    %894 = vmatprep.subr.mxu0 0.0
    %895 = vmatpush1.msra.mxu0 0.0
    %896 = vmatprep.mubr.f32.mxu0 0.0
    %897 = vmatmul.mubr.f32.gmra.mrb[0].mxu0 %v830
    %v898 = vpop.f32.mrb[0].mxu0
    %v899 = vadd.f32 %v827, %v898
    %v900 = vpop.f32.mrb[0].mxu0
    %901 = vdwg.mxu0
    %v902 = vmul.f32 %v899, %v335
    %v903 = vld [vmem:[#allocation8 + $0x1b8] sm:$0xff]
    %v904 = vld [vmem:[#allocation8 + $0x1d8] sm:$0xff]
    %v905 = vld [vmem:[#allocation8 + $0x1f8] sm:$0xff]
    %v906 = vld [vmem:[#allocation8 + $0x218] sm:$0xff]
    %v907 = vld [vmem:[#allocation8 + $0x2b8] sm:$0x3]
    %912 = vrot.lane.b32.xlu0 %v903, 64
    %v913 = vpop.permute.xlu0 %912
    %914 = vrot.lane.b32.xlu0 %v904, 64
    %v915 = vpop.permute.xlu0 %914
    %916 = vrot.lane.b32.xlu0 %v905, 64
    %v917 = vpop.permute.xlu0 %916
    %918 = vrot.lane.b32.xlu0 %v906, 64
    %v919 = vpop.permute.xlu0 %918
    %925 = vrot.lane.b32.xlu0 %v907, 64
    %v926 = vpop.permute.xlu0 %925
    %v929 = vsel %vm165, %v902, 0
    %931 = vmatprep.subr.mxu0 0.0
    %932 = vmatpush1.msra.mxu0 %v913
    %933 = vmatprep.subr.mxu0 0.0
    %934 = vmatpush1.msra.mxu0 %v915
    %935 = vmatprep.subr.mxu0 0.0
    %936 = vmatpush1.msra.mxu0 %v917
    %937 = vmatprep.subr.mxu0 0.0
    %938 = vmatpush1.msra.mxu0 %v919
    %939 = vmatprep.subr.mxu0 0.0
    %940 = vmatpush1.msra.mxu0 0.0
    %941 = vmatprep.subr.mxu0 0.0
    %942 = vmatpush1.msra.mxu0 0.0
    %943 = vmatprep.subr.mxu0 0.0
    %944 = vmatpush1.msra.mxu0 0.0
    %945 = vmatprep.subr.mxu0 0.0
    %946 = vmatpush1.msra.mxu0 0.0
    %947 = vmatprep.subr.mxu0 0.0
    %948 = vmatpush1.msra.mxu0 0.0
    %949 = vmatprep.subr.mxu0 0.0
    %950 = vmatpush1.msra.mxu0 0.0
    %951 = vmatprep.subr.mxu0 0.0
    %952 = vmatpush1.msra.mxu0 0.0
    %953 = vmatprep.subr.mxu0 0.0
    %954 = vmatpush1.msra.mxu0 0.0
    %955 = vmatprep.subr.mxu0 0.0
    %956 = vmatpush1.msra.mxu0 0.0
    %957 = vmatprep.subr.mxu0 0.0
    %958 = vmatpush1.msra.mxu0 0.0
    %959 = vmatprep.subr.mxu0 0.0
    %960 = vmatpush1.msra.mxu0 0.0
    %961 = vmatprep.subr.mxu0 0.0
    %962 = vmatpush1.msra.mxu0 0.0
    %963 = vmatprep.subr.mxu0 0.0
    %964 = vmatpush1.msra.mxu0 0.0
    %965 = vmatprep.subr.mxu0 0.0
    %966 = vmatpush1.msra.mxu0 0.0
    %967 = vmatprep.subr.mxu0 0.0
    %968 = vmatpush1.msra.mxu0 0.0
    %969 = vmatprep.subr.mxu0 0.0
    %970 = vmatpush1.msra.mxu0 0.0
    %971 = vmatprep.subr.mxu0 0.0
    %972 = vmatpush1.msra.mxu0 0.0
    %973 = vmatprep.subr.mxu0 0.0
    %974 = vmatpush1.msra.mxu0 0.0
    %975 = vmatprep.subr.mxu0 0.0
    %976 = vmatpush1.msra.mxu0 0.0
    %977 = vmatprep.subr.mxu0 0.0
    %978 = vmatpush1.msra.mxu0 0.0
    %979 = vmatprep.subr.mxu0 0.0
    %980 = vmatpush1.msra.mxu0 0.0
    %981 = vmatprep.subr.mxu0 0.0
    %982 = vmatpush1.msra.mxu0 0.0
    %983 = vmatprep.subr.mxu0 0.0
    %984 = vmatpush1.msra.mxu0 0.0
    %985 = vmatprep.subr.mxu0 0.0
    %986 = vmatpush1.msra.mxu0 0.0
    %987 = vmatprep.subr.mxu0 0.0
    %988 = vmatpush1.msra.mxu0 0.0
    %989 = vmatprep.subr.mxu0 0.0
    %990 = vmatpush1.msra.mxu0 0.0
    %991 = vmatprep.subr.mxu0 0.0
    %992 = vmatpush1.msra.mxu0 0.0
    %993 = vmatprep.subr.mxu0 0.0
    %994 = vmatpush1.msra.mxu0 0.0
    %995 = vmatprep.mubr.f32.mxu0 0.0
    %996 = vmatmul.mubr.f32.gmra.mrb[0].mxu0 %v929
    %v997 = vpop.f32.mrb[0].mxu0
    %v998 = vadd.f32 %v926, %v997
    %v999 = vpop.f32.mrb[0].mxu0
    %1000 = vdwg.mxu0
    %vm1001 = vcmask 9216
    %1002 = vst.msk [vmem:[#allocation9] sm:$0x3] %vm1001, %v998
    // Predicated region
    $region26: #{predictor_forward.1} parent=1 // pred_check
      _
    $region27: #{predictor_forward.1} parent=1 // pred_check_branch
      %1004 = sbr.rel (0) target = $region29
    $region28: #{predictor_forward.1} parent=1 // pred_region
      %s1006 = ssub.s32 32, 32
      %1007 = vsyncadd [#allocation5], %s1006
      %s1009 = sshll.u32 [#allocation9], 4
      %s1010 = int_to_ptr.vmem [resolvable:$true] %s1009
      %1012 = dma.vmem_to_hbm [thread:$0]  %s1010, 32, %s3, [#allocation5]
    $region29: #{predictor_forward.1} parent=1 // pred_fallthru
      _
    // Predicated region
    $region30: #{predictor_forward.1} parent=1 // pred_check
      _
    $region31: #{predictor_forward.1} parent=1 // pred_check_branch
      %1014 = sbr.rel (0) target = $region33
    $region32: #{predictor_forward.1} parent=1 // pred_region
      %1015 = dma.done [#allocation5], 32
    $region33: #{predictor_forward.1} parent=1 // pred_fallthru
      _
    %1016 = vsyncpa [#allocation4], 1
    %1017 = vsyncpa [#allocation7], 1
    %1018 = vsyncpa [#allocation5], 1

</llo_original>
